<compile_context>
chip_gen: v7x
topology: tpu7x:2x2x1
jax: 0.10.0
libtpu: 0.0.40
codegen_flags: <defaults>
</compile_context>

<pallas_src>
import functools

import jax
import jax.numpy as jnp
import numpy as np
from jax.experimental import pallas as pl
from jax.experimental.pallas import tpu as pltpu


def _round_up(x, m):
    return ((x + m - 1) // m) * m


def _embed_kernel(idx_ref, tab_ref, out_ref, *, embed_mode):
    """One (tm, d_model) output tile.

    idx_ref: (tm, 2) int32 -- col 0 = src row, col 1 = type row (already
             offset by V into the row-stacked table).
    tab_ref: (K_pad, d)    -- row-stacked [intensity_table; type_table; 0-pad].
    out_ref: (tm, d_model) -- d_model = d ('add') or 2*d ('concat').
    """
    tm = idx_ref.shape[0]
    K = tab_ref.shape[0]

    idx = idx_ref[...]                       # (tm, 2)
    src = idx[:, 0:1]                        # (tm, 1)
    typ = idx[:, 1:2]                        # (tm, 1)

    cols = jax.lax.broadcasted_iota(jnp.int32, (tm, K), 1)
    tab = tab_ref[...]

    if embed_mode == "add":
        # Two-hot selector: one matmul sums the two embeddings on the MXU.
        twohot = jnp.logical_or(cols == src, cols == typ).astype(tab.dtype)
        acc = jnp.dot(twohot, tab, preferred_element_type=jnp.float32)
    else:  # 'concat'
        # Two one-hot matmuls against the shared (K, d) table, concatenated
        # in-register -> single lane-dense (tm, 2d) store.
        src_hot = (cols == src).astype(tab.dtype)
        typ_hot = (cols == typ).astype(tab.dtype)
        ei = jnp.dot(src_hot, tab, preferred_element_type=jnp.float32)
        et = jnp.dot(typ_hot, tab, preferred_element_type=jnp.float32)
        acc = jnp.concatenate([ei, et], axis=-1)

    out_ref[...] = acc.astype(out_ref.dtype)


def nn_embed_with_type_feature(x, intensity_table, type_table,
                               embed_mode="add", *, block_m=512,
                               out_dtype=None):
    """x: (B, 3, S) int.  Returns (B, S, d_model).

    intensity_table: (source_size, d)  (d = d_model for 'add',
                                        d = d_model // 2 for 'concat')
    type_table:      (n_types, d)
    block_m:   rows of the flattened (B*S) dimension per grid step.
    out_dtype: output dtype (defaults to the table dtype); pass bf16 to halve
               the output writeback if downstream runs bf16.
    """
    assert embed_mode in ("add", "concat")
    B, three, S = x.shape
    assert three == 3
    V, d = intensity_table.shape
    T, dt = type_table.shape
    assert d == dt
    d_model = d if embed_mode == "add" else 2 * d
    if out_dtype is None:
        out_dtype = intensity_table.dtype

    # Row-stacked table shared by both modes; pad rows to a multiple of 8
    # (padded rows are never selected).
    combined = jnp.concatenate([intensity_table, type_table], axis=0)
    KT = combined.shape[0]
    KT_pad = _round_up(KT, 8)
    if KT_pad != KT:
        combined = jnp.concatenate(
            [combined, jnp.zeros((KT_pad - KT, d), combined.dtype)], axis=0)

    # Pack [src, typ+V] into one (M, 2) index array -> one index DMA per step.
    M = B * S
    src = x[:, 0, :].reshape(M).astype(jnp.int32)
    typ = x[:, -1, :].reshape(M).astype(jnp.int32) + V
    idx = jnp.stack([src, typ], axis=1)                       # (M, 2)

    # Tile M.  tm multiple of 8; pad M up to a multiple of tm (padded rows
    # use index 0 -> valid row, result sliced away below).
    tm = _round_up(min(block_m, _round_up(M, 8)), 8)
    M_pad = _round_up(M, tm)
    if M_pad != M:
        idx = jnp.concatenate(
            [idx, jnp.zeros((M_pad - M, 2), jnp.int32)], axis=0)
    grid = (M_pad // tm,)

    kernel = functools.partial(_embed_kernel, embed_mode=embed_mode)

    out2d = pl.pallas_call(
        kernel,
        out_shape=jax.ShapeDtypeStruct((M_pad, d_model), out_dtype),
        grid_spec=pltpu.PrefetchScalarGridSpec(
            num_scalar_prefetch=0,
            grid=grid,
            in_specs=[
                pl.BlockSpec((tm, 2), lambda i: (i, 0)),        # packed indices
                pl.BlockSpec((KT_pad, d), lambda i: (0, 0)),    # shared table (VMEM-resident)
            ],
            out_specs=pl.BlockSpec((tm, d_model), lambda i: (i, 0)),
        ),
        compiler_params=pltpu.CompilerParams(
            # Steps along M are independent -> shard across TCs on v7x.
            dimension_semantics=("parallel",)),
    )(idx, combined)

    return out2d[:M].reshape(B, S, d_model)


def make_params(key, source_size, d_model, padding_idx, embed_mode="add"):
    """Deterministic synthetic parameters mirroring nn.Embedding init:
    N(0,1) weights with the padding_idx row zeroed (both embeddings are
    constructed with padding_idx in the PyTorch module)."""
    assert d_model % 2 == 0
    d = d_model // 2 if embed_mode == "concat" else d_model
    k1, k2 = jax.random.split(key)
    intensity = jax.random.normal(k1, (source_size, d), dtype=jnp.float32)
    intensity = intensity.at[padding_idx].set(0.0)
    n_types = 4
    type_tab = jax.random.normal(k2, (n_types, d), dtype=jnp.float32)
    type_tab = type_tab.at[padding_idx].set(0.0)
    return intensity, type_tab


def reference(x, intensity_table, type_table, embed_mode="add"):
    src = x[:, 0, :]
    styp = x[:, -1, :]
    ei = jnp.take(intensity_table, src, axis=0)
    et = jnp.take(type_table, styp, axis=0)
    if embed_mode == "add":
        return ei + et
    return jnp.concatenate([ei, et], axis=-1)


def _make_inputs(key, batch, seq_len, source_size):
    k_src, k_loc, k_typ = jax.random.split(key, 3)
    src_ids = jax.random.randint(k_src, (batch, seq_len), 0, source_size, dtype=jnp.int32)
    loc_ids = jax.random.randint(k_loc, (batch, seq_len), 0, source_size, dtype=jnp.int32)
    typ_ids = jax.random.randint(k_typ, (batch, seq_len), 0, 4, dtype=jnp.int32)
    return jnp.stack([src_ids, loc_ids, typ_ids], axis=1)   # (B, 3, S)


if __name__ == "__main__":
    key = jax.random.PRNGKey(0)
    source_size, d_model, padding_idx = 32, 128, 0
    kx, kx2, kp = jax.random.split(key, 3)

    ok = True

    # Small case: single grid step.
    x_small = _make_inputs(kx, 2, 16, source_size)           # (2, 3, 16), M=32
    for mode in ("add", "concat"):
        int_tab, typ_tab = make_params(kp, source_size, d_model, padding_idx, embed_mode=mode)
        out = jax.block_until_ready(
            nn_embed_with_type_feature(x_small, int_tab, typ_tab, embed_mode=mode))
        ref = reference(x_small, int_tab, typ_tab, embed_mode=mode)
        if out.shape != (2, 16, d_model):
            ok = False
        if not np.allclose(np.asarray(out), np.asarray(ref), atol=1e-5, rtol=1e-5):
            ok = False

    # Larger case: exercises M tiling, multi-step grid and M padding
    # (M = 4*40 = 160, block_m=64 -> M_pad=192, grid=(3,)).
    x_big = _make_inputs(kx2, 4, 40, source_size)
    for mode in ("add", "concat"):
        int_tab, typ_tab = make_params(kp, source_size, d_model, padding_idx, embed_mode=mode)
        out = jax.block_until_ready(
            nn_embed_with_type_feature(x_big, int_tab, typ_tab, embed_mode=mode, block_m=64))
        ref = reference(x_big, int_tab, typ_tab, embed_mode=mode)
        if out.shape != (4, 40, d_model):
            ok = False
        if not np.allclose(np.asarray(out), np.asarray(ref), atol=1e-5, rtol=1e-5):
            ok = False

    if ok:
        print("KERNEL_OK")
    else:
        raise SystemExit("mismatch vs reference")
</pallas_src>

<mosaic_0001>
module attributes {stable_mosaic.version = 11 : i64} {
  func.func @_embed_kernel(%arg0: i32, %arg1: memref<32x2xi32, #tpu.memory_space<vmem>>, %arg2: memref<40x128xf32, #tpu.memory_space<vmem>>, %arg3: memref<32x128xf32, #tpu.memory_space<vmem>>) attributes {dimension_semantics = [#tpu.dimension_semantics<parallel>], iteration_bounds = array<i64: 1>, scalar_prefetch = 0 : i64, scratch_operands = 0 : i64, tpu.core_type = #tpu.core_type<tc>, window_params = [{transform_indices = @transform_0, window_bounds = array<i64: 32, 2>}, {pipeline_mode = #tpu.pipeline_mode<synchronous>, transform_indices = @transform_1, window_bounds = array<i64: 40, 128>}, {transform_indices = @transform_2, window_bounds = array<i64: 32, 128>}]} {
    %c0 = arith.constant 0 : index
    %c0_0 = arith.constant 0 : index
    %0 = vector.load %arg1[%c0, %c0_0] : memref<32x2xi32, #tpu.memory_space<vmem>>, vector<32x2xi32>
    %1 = vector.extract_strided_slice %0 {offsets = [0, 0], sizes = [32, 1], strides = [1, 1]} : vector<32x2xi32> to vector<32x1xi32>
    %2 = vector.extract_strided_slice %0 {offsets = [0, 1], sizes = [32, 1], strides = [1, 1]} : vector<32x2xi32> to vector<32x1xi32>
    %3 = tpu.iota {dimensions = array<i32: 1>} : vector<32x40xi32>
    %c0_1 = arith.constant 0 : index
    %c0_2 = arith.constant 0 : index
    %4 = vector.load %arg2[%c0_1, %c0_2] : memref<40x128xf32, #tpu.memory_space<vmem>>, vector<40x128xf32>
    %5 = vector.broadcast %1 : vector<32x1xi32> to vector<32x40xi32>
    %6 = arith.cmpi eq, %3, %5 : vector<32x40xi32>
    %7 = vector.broadcast %2 : vector<32x1xi32> to vector<32x40xi32>
    %8 = arith.cmpi eq, %3, %7 : vector<32x40xi32>
    %9 = arith.ori %6, %8 : vector<32x40xi1>
    %10 = arith.extui %9 : vector<32x40xi1> to vector<32x40xi32>
    %11 = arith.sitofp %10 : vector<32x40xi32> to vector<32x40xf32>
    %cst = arith.constant dense<0.000000e+00> : vector<32x128xf32>
    %12 = tpu.matmul %11, %4, %cst {dimension_numbers = #tpu.dot_dimension_numbers<[1], [0], [0], [1], [0, 0, 1, 1], [], []>} : vector<32x40xf32>, vector<40x128xf32>, vector<32x128xf32> -> vector<32x128xf32>
    %c0_3 = arith.constant 0 : index
    %c0_4 = arith.constant 0 : index
    %13 = vector.load %arg3[%c0_3, %c0_4] : memref<32x128xf32, #tpu.memory_space<vmem>>, vector<32x128xf32>
    tpu.vector_store %arg3[%c0_3, %c0_4], %12 {strides = array<i32>} : memref<32x128xf32, #tpu.memory_space<vmem>>, vector<32x128xf32>,
    return
  }
  func.func @transform_0(%arg0: i32) -> (i32, i32) {
    %c0_i32 = arith.constant 0 : i32
    %c0_i32_0 = arith.constant 0 : i32
    return %arg0, %c0_i32 : i32, i32
  }
  func.func @transform_1(%arg0: i32) -> (i32, i32) {
    %c0_i32 = arith.constant 0 : i32
    %c0_i32_0 = arith.constant 0 : i32
    %c0_i32_1 = arith.constant 0 : i32
    return %c0_i32, %c0_i32_0 : i32, i32
  }
  func.func @transform_2(%arg0: i32) -> (i32, i32) {
    %c0_i32 = arith.constant 0 : i32
    %c0_i32_0 = arith.constant 0 : i32
    return %arg0, %c0_i32 : i32, i32
  }
}

</mosaic_0001>

<llo_original>
// kernel: tpu_custom_call.1
$region0: #{tpu_custom_call.1}
  #allocation0 [shape = 'u32[]', space=smem, size = 0x4, offset = 0x4, fixed_abs, tag = 'smem constant byte address 0x4 - core index']
  #allocation1 [shape = 'u32[144,128]{1,0:T(1,128)}', space=vmem, size = 0x12000, scoped, tag = 'internal scratch']
  %s0 = inlined_call_operand.vmem [shape: s32[32,2], index: 0, kind: input, shape index: {}]
  %s1 = inlined_call_operand.hbm [shape: f32[40,128], index: 1, kind: input, shape index: {}]
  %s2 = inlined_call_operand.hbm [shape: f32[32,128], index: 2, kind: output, shape index: {}]
  %s3 = sld [smem:[#allocation0]]
  $region22: #{tpu_custom_call.1} parent=0
    _
  %s5 = ssub.s32 1, %s3
  %s6 = scalar_select 0, %s5, %s3
  $region1: #{tpu_custom_call.1} parent=0
    #allocation2 [shape = 'u8[20480]{0}', space=vmem, size = 0x5000, scoped, tag = 'input window, operand 1, single buffered']
    #allocation3 [shape = 's32[1]{0}', space=sflag, size = 0x4, scoped, tag = 'scoped memory for tpu_custom_call.1']
    #allocation4 [shape = 's32[1]{0}', space=sflag, size = 0x4, scoped, tag = 'scoped memory for tpu_custom_call.1']
    #allocation5 [shape = 'u8[16384]{0}', space=vmem, size = 0x4000, scoped, tag = 'output window, operand 0, single buffered']
    %7 = vsyncpa [#allocation3], 0
    %8 = vsyncpa [#allocation4], 0
    // Predicated region
    $region2: #{tpu_custom_call.1} parent=1 // pred_check
      _
    $region3: #{tpu_custom_call.1} parent=1 // pred_check_branch
      %10 = sbr.rel (0) target = $region5
    $region4: #{tpu_custom_call.1} parent=1 // pred_region
      _
    $region5: #{tpu_custom_call.1} parent=1 // pred_fallthru
      _
    // Predicated region
    $region6: #{tpu_custom_call.1} parent=1 // pred_check
      _
    $region7: #{tpu_custom_call.1} parent=1 // pred_check_branch
      %12 = sbr.rel (0) target = $region9
    $region8: #{tpu_custom_call.1} parent=1 // pred_region
      %s14 = ssub.s32 640, 640
      %15 = vsyncadd [#allocation3], %s14
      %s16 = sshll.u32 [#allocation2], 4
      %s17 = int_to_ptr.vmem [resolvable:$true] %s16
      %22 = dma.hbm_to_vmem [thread:$0]  %s1, 640, %s17, [#allocation3], 128, 128, 8
    $region9: #{tpu_custom_call.1} parent=1 // pred_fallthru
      _
    // Predicated region
    $region10: #{tpu_custom_call.1} parent=1 // pred_check
      _
    $region11: #{tpu_custom_call.1} parent=1 // pred_check_branch
      %24 = sbr.rel (0) target = $region13
    $region12: #{tpu_custom_call.1} parent=1 // pred_region
      %25 = dma.done [#allocation3], 640
    $region13: #{tpu_custom_call.1} parent=1 // pred_fallthru
      _
    %v26 = vld [vmem:[%s0] sm:$0xff]
    %v27 = vld [vmem:[%s0 + $0x8] sm:$0xff]
    %v28 = vld [vmem:[%s0 + $0x10] sm:$0xff]
    %v29 = vld [vmem:[%s0 + $0x18] sm:$0xff]
    %v30 = vlaneseq
    %v31 = vand.u32 %v30, 127
    %v32 = vld [vmem:[#allocation2] sm:$0xff]
    %v33 = vld [vmem:[#allocation2 + $0x8] sm:$0xff]
    %v34 = vld [vmem:[#allocation2 + $0x10] sm:$0xff]
    %v35 = vld [vmem:[#allocation2 + $0x18] sm:$0xff]
    %v36 = vld [vmem:[#allocation2 + $0x20] sm:$0xff]
    %37 = vset.pattern.permute.xlu0 0
    %38 = vperm.xlu0 %37, %v26
    %v39 = vpop.permute.xlu0 %38
    %40 = vset.pattern.permute.xlu0 0
    %41 = vperm.xlu0 %40, %v27
    %v42 = vpop.permute.xlu0 %41
    %43 = vset.pattern.permute.xlu0 0
    %44 = vperm.xlu0 %43, %v28
    %v45 = vpop.permute.xlu0 %44
    %46 = vset.pattern.permute.xlu0 0
    %47 = vperm.xlu0 %46, %v29
    %v48 = vpop.permute.xlu0 %47
    %vm49 = vcmp.eq.s32.totalorder %v31, %v39
    %vm50 = vcmp.eq.s32.totalorder %v31, %v42
    %vm51 = vcmp.eq.s32.totalorder %v31, %v45
    %vm52 = vcmp.eq.s32.totalorder %v31, %v48
    %53 = vset.pattern.permute.xlu0 1
    %54 = vperm.xlu0 %53, %v26
    %v55 = vpop.permute.xlu0 %54
    %56 = vset.pattern.permute.xlu0 1
    %57 = vperm.xlu0 %56, %v27
    %v58 = vpop.permute.xlu0 %57
    %59 = vset.pattern.permute.xlu0 1
    %60 = vperm.xlu0 %59, %v28
    %v61 = vpop.permute.xlu0 %60
    %62 = vset.pattern.permute.xlu0 1
    %63 = vperm.xlu0 %62, %v29
    %v64 = vpop.permute.xlu0 %63
    %vm65 = vcmp.eq.s32.totalorder %v31, %v55
    %vm66 = vcmp.eq.s32.totalorder %v31, %v58
    %vm67 = vcmp.eq.s32.totalorder %v31, %v61
    %vm68 = vcmp.eq.s32.totalorder %v31, %v64
    %vm69 = vmor %vm49, %vm65
    %vm70 = vmor %vm50, %vm66
    %vm71 = vmor %vm51, %vm67
    %vm72 = vmor %vm52, %vm68
    %v73 = vsel %vm69, 1, 0
    %v74 = vsel %vm70, 1, 0
    %v75 = vsel %vm71, 1, 0
    %v76 = vsel %vm72, 1, 0
    %v77 = vcvt.s32.f32 %v73
    %v78 = vcvt.s32.f32 %v74
    %v79 = vcvt.s32.f32 %v75
    %v80 = vcvt.s32.f32 %v76
    %vm81 = vcmask 326656
    %v83 = vsel %vm81, %v77, 0
    %v86 = vsel %vm81, %v78, 0
    %v89 = vsel %vm81, %v79, 0
    %v92 = vsel %vm81, %v80, 0
    %94 = vmatprep.subr.mxu0 0.0
    %95 = vmatpush1.msra.mxu0 %v32
    %96 = vmatprep.subr.mxu0 0.0
    %97 = vmatpush1.msra.mxu0 %v33
    %98 = vmatprep.subr.mxu0 0.0
    %99 = vmatpush1.msra.mxu0 %v34
    %100 = vmatprep.subr.mxu0 0.0
    %101 = vmatpush1.msra.mxu0 %v35
    %102 = vmatprep.subr.mxu0 0.0
    %103 = vmatpush1.msra.mxu0 %v36
    %104 = vmatprep.subr.mxu0 0.0
    %105 = vmatpush1.msra.mxu0 0.0
    %106 = vmatprep.subr.mxu0 0.0
    %107 = vmatpush1.msra.mxu0 0.0
    %108 = vmatprep.subr.mxu0 0.0
    %109 = vmatpush1.msra.mxu0 0.0
    %110 = vmatprep.subr.mxu0 0.0
    %111 = vmatpush1.msra.mxu0 0.0
    %112 = vmatprep.subr.mxu0 0.0
    %113 = vmatpush1.msra.mxu0 0.0
    %114 = vmatprep.subr.mxu0 0.0
    %115 = vmatpush1.msra.mxu0 0.0
    %116 = vmatprep.subr.mxu0 0.0
    %117 = vmatpush1.msra.mxu0 0.0
    %118 = vmatprep.subr.mxu0 0.0
    %119 = vmatpush1.msra.mxu0 0.0
    %120 = vmatprep.subr.mxu0 0.0
    %121 = vmatpush1.msra.mxu0 0.0
    %122 = vmatprep.subr.mxu0 0.0
    %123 = vmatpush1.msra.mxu0 0.0
    %124 = vmatprep.subr.mxu0 0.0
    %125 = vmatpush1.msra.mxu0 0.0
    %126 = vmatprep.subr.mxu0 0.0
    %127 = vmatpush1.msra.mxu0 0.0
    %128 = vmatprep.subr.mxu0 0.0
    %129 = vmatpush1.msra.mxu0 0.0
    %130 = vmatprep.subr.mxu0 0.0
    %131 = vmatpush1.msra.mxu0 0.0
    %132 = vmatprep.subr.mxu0 0.0
    %133 = vmatpush1.msra.mxu0 0.0
    %134 = vmatprep.subr.mxu0 0.0
    %135 = vmatpush1.msra.mxu0 0.0
    %136 = vmatprep.subr.mxu0 0.0
    %137 = vmatpush1.msra.mxu0 0.0
    %138 = vmatprep.subr.mxu0 0.0
    %139 = vmatpush1.msra.mxu0 0.0
    %140 = vmatprep.subr.mxu0 0.0
    %141 = vmatpush1.msra.mxu0 0.0
    %142 = vmatprep.subr.mxu0 0.0
    %143 = vmatpush1.msra.mxu0 0.0
    %144 = vmatprep.subr.mxu0 0.0
    %145 = vmatpush1.msra.mxu0 0.0
    %146 = vmatprep.subr.mxu0 0.0
    %147 = vmatpush1.msra.mxu0 0.0
    %148 = vmatprep.subr.mxu0 0.0
    %149 = vmatpush1.msra.mxu0 0.0
    %150 = vmatprep.subr.mxu0 0.0
    %151 = vmatpush1.msra.mxu0 0.0
    %152 = vmatprep.subr.mxu0 0.0
    %153 = vmatpush1.msra.mxu0 0.0
    %154 = vmatprep.subr.mxu0 0.0
    %155 = vmatpush1.msra.mxu0 0.0
    %156 = vmatprep.subr.mxu0 0.0
    %157 = vmatpush1.msra.mxu0 0.0
    %158 = vmatprep.mubr.f32.mxu0 0.0
    %159 = vmatmul.mubr.f32.gmra.mrb[0].mxu0 %v83
    %v160 = vpop.f32.mrb[0].mxu0
    %v161 = vadd.f32 0.0, %v160
    %v162 = vpop.f32.mrb[0].mxu0
    %163 = vmatprep.mubr.f32.mxu0 0.0
    %164 = vmatmul.mubr.f32.gmra.mrb[0].mxu0 %v86
    %v165 = vpop.f32.mrb[0].mxu0
    %v166 = vadd.f32 0.0, %v165
    %v167 = vpop.f32.mrb[0].mxu0
    %168 = vmatprep.mubr.f32.mxu0 0.0
    %169 = vmatmul.mubr.f32.gmra.mrb[0].mxu0 %v89
    %v170 = vpop.f32.mrb[0].mxu0
    %v171 = vadd.f32 0.0, %v170
    %v172 = vpop.f32.mrb[0].mxu0
    %173 = vmatprep.mubr.f32.mxu0 0.0
    %174 = vmatmul.mubr.f32.gmra.mrb[0].mxu0 %v92
    %v175 = vpop.f32.mrb[0].mxu0
    %v176 = vadd.f32 0.0, %v175
    %v177 = vpop.f32.mrb[0].mxu0
    %178 = vdwg.mxu0
    %179 = vst [vmem:[#allocation5] sm:$0xff] %v161
    %180 = vst [vmem:[#allocation5 + $0x8] sm:$0xff] %v166
    %181 = vst [vmem:[#allocation5 + $0x10] sm:$0xff] %v171
    %182 = vst [vmem:[#allocation5 + $0x18] sm:$0xff] %v176
    // Predicated region
    $region14: #{tpu_custom_call.1} parent=1 // pred_check
      _
    $region15: #{tpu_custom_call.1} parent=1 // pred_check_branch
      %184 = sbr.rel (0) target = $region17
    $region16: #{tpu_custom_call.1} parent=1 // pred_region
      %s186 = ssub.s32 512, 512
      %187 = vsyncadd [#allocation4], %s186
      %s188 = sshll.u32 [#allocation5], 4
      %s189 = int_to_ptr.vmem [resolvable:$true] %s188
      %194 = dma.vmem_to_hbm [thread:$0]  %s189, 512, %s2, [#allocation4], 128, 128, 8
    $region17: #{tpu_custom_call.1} parent=1 // pred_fallthru
      _
    // Predicated region
    $region18: #{tpu_custom_call.1} parent=1 // pred_check
      _
    $region19: #{tpu_custom_call.1} parent=1 // pred_check_branch
      %196 = sbr.rel (0) target = $region21
    $region20: #{tpu_custom_call.1} parent=1 // pred_region
      %197 = dma.done [#allocation4], 512
    $region21: #{tpu_custom_call.1} parent=1 // pred_fallthru
      _
    %198 = vsyncpa [#allocation3], 1
    %199 = vsyncpa [#allocation4], 1

</llo_original>
